<compile_context>
chip_gen: v7x
topology: tpu7x:2x2x1
jax: 0.10.0
libtpu: 0.0.40
codegen_flags: <defaults>
</compile_context>

<pallas_src>
import math

import jax
import jax.numpy as jnp
from jax.experimental import pallas as pl
from jax.experimental.pallas import tpu as pltpu

STATUS_DIM = 4                         # len(status)
EMB_DIM = 32                           # Embedding(3, 32)
HIDDEN_DIM = 32                        # hidden_dim of BrainValue
HEAD_DIM = STATUS_DIM + 4              # status ++ puck_pos(2) ++ self_pos(2)
INPUT_DIM = HEAD_DIM + 5 * EMB_DIM     # = 168 (input_dim of the first Linear)
ACT_DIM = HEAD_DIM + 5 * 3 + 1         # = 24 compressed activation (+1 = bias col)

# Row layout of the packed weight slab (all section starts sublane-aligned).
ROW_W1 = 0     # 24 rows, cols 0:32  -> folded W1 (row 23 = b1, paired w/ 1-col)
ROW_W2 = 24    # 32 rows, cols 0:32  -> W2
ROW_B2 = 56    # 1 row,   cols 0:32  -> b2
ROW_W3 = 64    # 32 rows, 128 cols   -> W3 padded (only lane 0 nonzero)
ROW_B3 = 96    # 1 row,   128 cols   -> b3 in lane 0
SLAB_ROWS = 104
SLAB_COLS = 128


def brain_value_kernel(x_ref, w_ref, o_ref):
    """3 matmuls (Linear, Linear, ReLU, Linear) on a (TB, 24) activation tile."""
    f32 = jnp.float32
    x = x_ref[...]                                                  # (TB, 24)

    # layer 1 (embeddings + b1 already folded into the slab rows 0:24)
    h1 = jnp.dot(x, w_ref[ROW_W1:ROW_W1 + ACT_DIM, 0:HIDDEN_DIM],
                 preferred_element_type=f32)                        # (TB, 32)

    # layer 2 + ReLU
    h2 = jnp.dot(h1, w_ref[ROW_W2:ROW_W2 + HIDDEN_DIM, 0:HIDDEN_DIM],
                 preferred_element_type=f32)
    h2 = h2 + w_ref[ROW_B2:ROW_B2 + 1, 0:HIDDEN_DIM]                # (TB, 32)
    h3 = jnp.maximum(h2, 0.0)

    # layer 3 against the lane-padded (32, 128) W3 -> full-lane unmasked store
    o_ref[...] = (jnp.dot(h3, w_ref[ROW_W3:ROW_W3 + HIDDEN_DIM, :],
                          preferred_element_type=f32)
                  + w_ref[ROW_B3:ROW_B3 + 1, :])                    # (TB, 128)


def _run(x_act, slab, tb):
    """pallas_call over B/tb tiles; the weight slab stays resident in VMEM."""
    bp = x_act.shape[0]
    return pl.pallas_call(
        brain_value_kernel,
        out_shape=jax.ShapeDtypeStruct((bp, SLAB_COLS), jnp.float32),
        grid_spec=pltpu.PrefetchScalarGridSpec(
            num_scalar_prefetch=0,
            grid=(bp // tb,),
            in_specs=[
                pl.BlockSpec((tb, ACT_DIM), lambda i: (i, 0)),
                pl.BlockSpec((SLAB_ROWS, SLAB_COLS), lambda i: (0, 0)),
            ],
            out_specs=pl.BlockSpec((tb, SLAB_COLS), lambda i: (i, 0)),
        ),
        compiler_params=pltpu.CompilerParams(
            dimension_semantics=("parallel",)),   # shards B-tiles across TCs (v7x)
    )(x_act, slab)


def build_activation(status, distances, positions):
    """(B,4),(B,5),(B,14) -> (B, 24) compressed activation (mirrors torch.cat)."""
    status = status.astype(jnp.float32)
    distances = distances.astype(jnp.float32)
    positions = positions.astype(jnp.float32)
    b = status.shape[0]
    parts = [status, positions[:, 0:4]]                 # status, puck_pos, self_pos
    for i in range(5):                                  # (pos_xy, distance) x 5
        parts.append(positions[:, 4 + 2 * i: 6 + 2 * i])
        parts.append(distances[:, i:i + 1])
    parts.append(jnp.ones((b, 1), jnp.float32))         # constant-1 column -> b1
    return jnp.concatenate(parts, axis=-1)              # (B, 24)


def brain_value_forward_batched(slab, status, distances, positions, tb=128):
    """Batched forward: (B,4),(B,5),(B,14) -> (B,) values."""
    b = status.shape[0]
    x = build_activation(status, distances, positions)
    bp = ((b + tb - 1) // tb) * tb
    if bp != b:
        x = jnp.pad(x, ((0, bp - b), (0, 0)))
    out = _run(x, slab, tb)
    return out[:b, 0]


def brain_value_forward(slab, status, distances, positions):
    """Single observation, torch-style: returns shape (1,)."""
    out = brain_value_forward_batched(slab, status[None], distances[None],
                                      positions[None], tb=8)
    return out.reshape(1)


def make_params(key):
    """Deterministic parameter init mirroring the torch module's shapes."""
    ks = jax.random.split(key, 5)
    eb = 1.0 / math.sqrt(EMB_DIM)
    team_emb = jax.random.uniform(ks[0], (3, EMB_DIM), jnp.float32, -eb, eb)
    enemy_emb = jax.random.uniform(ks[1], (3, EMB_DIM), jnp.float32, -eb, eb)

    def linear(k, fan_in, fan_out):
        kw, kb = jax.random.split(k)
        bound = 1.0 / math.sqrt(fan_in)
        w = jax.random.uniform(kw, (fan_in, fan_out), jnp.float32, -bound, bound)
        b = jax.random.uniform(kb, (fan_out,), jnp.float32, -bound, bound)
        return w, b

    w1, b1 = linear(ks[2], INPUT_DIM, HIDDEN_DIM)
    w2, b2 = linear(ks[3], HIDDEN_DIM, HIDDEN_DIM)
    w3, b3 = linear(ks[4], HIDDEN_DIM, 1)
    return dict(team_emb=team_emb, enemy_emb=enemy_emb,
                w1=w1, b1=b1, w2=w2, b2=b2, w3=w3, b3=b3)


def pack_params(p):
    """Fold embeddings + b1 into W1 and pack everything into one (104,128) slab."""
    w1_head = p["w1"][:HEAD_DIM]                                  # (8, 32)
    segs = p["w1"][HEAD_DIM:].reshape(5, EMB_DIM, HIDDEN_DIM)     # (5, 32, 32)
    folded = [(p["team_emb"] if i < 2 else p["enemy_emb"]) @ segs[i]  # (3, 32)
              for i in range(5)]
    w1_eff = jnp.concatenate([w1_head] + folded + [p["b1"][None, :]], axis=0)

    slab = jnp.zeros((SLAB_ROWS, SLAB_COLS), jnp.float32)
    slab = slab.at[ROW_W1:ROW_W1 + ACT_DIM, 0:HIDDEN_DIM].set(w1_eff)
    slab = slab.at[ROW_W2:ROW_W2 + HIDDEN_DIM, 0:HIDDEN_DIM].set(p["w2"])
    slab = slab.at[ROW_B2, 0:HIDDEN_DIM].set(p["b2"])
    slab = slab.at[ROW_W3:ROW_W3 + HIDDEN_DIM, 0].set(p["w3"][:, 0])
    slab = slab.at[ROW_B3, 0].set(p["b3"][0])
    return slab


def brain_value_reference(p, status, distances, positions):
    """Pure-JAX reference (same math as the torch module, unfused)."""
    status = status.astype(jnp.float32)
    distances = distances.astype(jnp.float32)
    positions = positions.astype(jnp.float32)
    t1 = jnp.concatenate([positions[4:6], distances[0:1]]) @ p["team_emb"]
    t2 = jnp.concatenate([positions[6:8], distances[1:2]]) @ p["team_emb"]
    e1 = jnp.concatenate([positions[8:10], distances[2:3]]) @ p["enemy_emb"]
    e2 = jnp.concatenate([positions[10:12], distances[3:4]]) @ p["enemy_emb"]
    e3 = jnp.concatenate([positions[12:14], distances[4:5]]) @ p["enemy_emb"]
    vec = jnp.concatenate([status, positions[0:2], positions[2:4],
                           t1, t2, e1, e2, e3])
    h1 = vec @ p["w1"] + p["b1"]
    h2 = h1 @ p["w2"] + p["b2"]
    h3 = jnp.maximum(h2, 0.0)
    return h3 @ p["w3"] + p["b3"]          # shape (1,)


if __name__ == "__main__":
    key = jax.random.PRNGKey(0)
    k_par, k_st, k_di, k_po, k_b = jax.random.split(key, 5)

    params = make_params(k_par)
    slab = pack_params(params)

    # --- single observation (mirrors the torch forward signature) ---
    status = jax.random.normal(k_st, (STATUS_DIM,), jnp.float32)
    distances = jax.random.normal(k_di, (5,), jnp.float32)
    positions = jax.random.normal(k_po, (14,), jnp.float32)

    out = brain_value_forward(slab, status, distances, positions)
    out = jax.block_until_ready(out)
    ref = brain_value_reference(params, status, distances, positions)
    assert out.shape == (1,)
    assert jnp.allclose(out, ref, atol=1e-4, rtol=1e-4), (out, ref)

    # --- batched path: 256 observations, grid over 128-row MXU tiles ---
    B = 256
    kbs, kbd, kbp = jax.random.split(k_b, 3)
    status_b = jax.random.normal(kbs, (B, STATUS_DIM), jnp.float32)
    distances_b = jax.random.normal(kbd, (B, 5), jnp.float32)
    positions_b = jax.random.normal(kbp, (B, 14), jnp.float32)

    out_b = brain_value_forward_batched(slab, status_b, distances_b, positions_b,
                                        tb=128)
    out_b = jax.block_until_ready(out_b)
    ref_b = jax.vmap(
        lambda s, d, z: brain_value_reference(params, s, d, z)[0]
    )(status_b, distances_b, positions_b)
    assert out_b.shape == (B,)
    assert jnp.allclose(out_b, ref_b, atol=1e-4, rtol=1e-4), (out_b, ref_b)

    print("KERNEL_OK")
</pallas_src>

<mosaic_0001>
module attributes {stable_mosaic.version = 11 : i64} {
  func.func @brain_value_kernel(%arg0: i32, %arg1: memref<8x24xf32, #tpu.memory_space<vmem>>, %arg2: memref<104x128xf32, #tpu.memory_space<vmem>>, %arg3: memref<8x128xf32, #tpu.memory_space<vmem>>) attributes {dimension_semantics = [#tpu.dimension_semantics<parallel>], iteration_bounds = array<i64: 1>, scalar_prefetch = 0 : i64, scratch_operands = 0 : i64, tpu.core_type = #tpu.core_type<tc>, window_params = [{transform_indices = @transform_0, window_bounds = array<i64: 8, 24>}, {pipeline_mode = #tpu.pipeline_mode<synchronous>, transform_indices = @transform_1, window_bounds = array<i64: 104, 128>}, {transform_indices = @transform_2, window_bounds = array<i64: 8, 128>}]} {
    %c0 = arith.constant 0 : index
    %c0_0 = arith.constant 0 : index
    %0 = vector.load %arg1[%c0, %c0_0] : memref<8x24xf32, #tpu.memory_space<vmem>>, vector<8x24xf32>
    %c0_1 = arith.constant 0 : index
    %c0_2 = arith.constant 0 : index
    %1 = vector.load %arg2[%c0_1, %c0_2] : memref<104x128xf32, #tpu.memory_space<vmem>>, vector<24x32xf32>
    %cst = arith.constant dense<0.000000e+00> : vector<8x32xf32>
    %2 = tpu.matmul %0, %1, %cst {dimension_numbers = #tpu.dot_dimension_numbers<[1], [0], [0], [1], [0, 0, 1, 1], [], []>} : vector<8x24xf32>, vector<24x32xf32>, vector<8x32xf32> -> vector<8x32xf32>
    %c24 = arith.constant 24 : index
    %c0_3 = arith.constant 0 : index
    %3 = vector.load %arg2[%c24, %c0_3] : memref<104x128xf32, #tpu.memory_space<vmem>>, vector<32x32xf32>
    %cst_4 = arith.constant dense<0.000000e+00> : vector<8x32xf32>
    %4 = tpu.matmul %2, %3, %cst_4 {dimension_numbers = #tpu.dot_dimension_numbers<[1], [0], [0], [1], [0, 0, 1, 1], [], []>} : vector<8x32xf32>, vector<32x32xf32>, vector<8x32xf32> -> vector<8x32xf32>
    %c56 = arith.constant 56 : index
    %c0_5 = arith.constant 0 : index
    %5 = vector.load %arg2[%c56, %c0_5] : memref<104x128xf32, #tpu.memory_space<vmem>>, vector<1x32xf32>
    %6 = vector.broadcast %5 : vector<1x32xf32> to vector<8x32xf32>
    %7 = arith.addf %4, %6 : vector<8x32xf32>
    %cst_6 = arith.constant 0.000000e+00 : f32
    %8 = vector.broadcast %cst_6 : f32 to vector<8x32xf32>
    %9 = arith.maximumf %7, %8 : vector<8x32xf32>
    %c64 = arith.constant 64 : index
    %c0_7 = arith.constant 0 : index
    %10 = vector.load %arg2[%c64, %c0_7] : memref<104x128xf32, #tpu.memory_space<vmem>>, vector<32x128xf32>
    %cst_8 = arith.constant dense<0.000000e+00> : vector<8x128xf32>
    %11 = tpu.matmul %9, %10, %cst_8 {dimension_numbers = #tpu.dot_dimension_numbers<[1], [0], [0], [1], [0, 0, 1, 1], [], []>} : vector<8x32xf32>, vector<32x128xf32>, vector<8x128xf32> -> vector<8x128xf32>
    %c96 = arith.constant 96 : index
    %c0_9 = arith.constant 0 : index
    %12 = vector.load %arg2[%c96, %c0_9] : memref<104x128xf32, #tpu.memory_space<vmem>>, vector<1x128xf32>
    %13 = vector.broadcast %12 : vector<1x128xf32> to vector<8x128xf32>
    %14 = arith.addf %11, %13 : vector<8x128xf32>
    %c0_10 = arith.constant 0 : index
    %c0_11 = arith.constant 0 : index
    %15 = vector.load %arg3[%c0_10, %c0_11] : memref<8x128xf32, #tpu.memory_space<vmem>>, vector<8x128xf32>
    tpu.vector_store %arg3[%c0_10, %c0_11], %14 {strides = array<i32>} : memref<8x128xf32, #tpu.memory_space<vmem>>, vector<8x128xf32>,
    return
  }
  func.func @transform_0(%arg0: i32) -> (i32, i32) {
    %c0_i32 = arith.constant 0 : i32
    %c0_i32_0 = arith.constant 0 : i32
    return %arg0, %c0_i32 : i32, i32
  }
  func.func @transform_1(%arg0: i32) -> (i32, i32) {
    %c0_i32 = arith.constant 0 : i32
    %c0_i32_0 = arith.constant 0 : i32
    %c0_i32_1 = arith.constant 0 : i32
    return %c0_i32, %c0_i32_0 : i32, i32
  }
  func.func @transform_2(%arg0: i32) -> (i32, i32) {
    %c0_i32 = arith.constant 0 : i32
    %c0_i32_0 = arith.constant 0 : i32
    return %arg0, %c0_i32 : i32, i32
  }
}

</mosaic_0001>

<llo_original>
// kernel: tpu_custom_call.1
$region0: #{tpu_custom_call.1}
  #allocation0 [shape = 'u32[]', space=smem, size = 0x4, offset = 0x4, fixed_abs, tag = 'smem constant byte address 0x4 - core index']
  #allocation1 [shape = 'u32[144,128]{1,0:T(1,128)}', space=vmem, size = 0x12000, scoped, tag = 'internal scratch']
  %s0 = inlined_call_operand.hbm [shape: f32[8,24], index: 0, kind: input, shape index: {}]
  %s1 = inlined_call_operand.hbm [shape: f32[104,128], index: 1, kind: input, shape index: {}]
  %s2 = inlined_call_operand.hbm [shape: f32[8,128], index: 2, kind: output, shape index: {}]
  %s3 = sld [smem:[#allocation0]]
  $region26: #{tpu_custom_call.1} parent=0
    _
  %s5 = ssub.s32 1, %s3
  %s6 = scalar_select 0, %s5, %s3
  $region1: #{tpu_custom_call.1} parent=0
    #allocation2 [shape = 'u8[4096]{0}', space=vmem, size = 0x1000, scoped, tag = 'input window, operand 0, single buffered']
    #allocation3 [shape = 's32[1]{0}', space=sflag, size = 0x4, scoped, tag = 'scoped memory for tpu_custom_call.1']
    #allocation4 [shape = 's32[1]{0}', space=sflag, size = 0x4, scoped, tag = 'scoped memory for tpu_custom_call.1']
    #allocation5 [shape = 'u8[53248]{0}', space=vmem, size = 0xd000, scoped, tag = 'input window, operand 1, single buffered']
    #allocation6 [shape = 's32[1]{0}', space=sflag, size = 0x4, scoped, tag = 'scoped memory for tpu_custom_call.1']
    #allocation7 [shape = 'u8[4096]{0}', space=vmem, size = 0x1000, scoped, tag = 'output window, operand 0, single buffered']
    %7 = vsyncpa [#allocation3], 0
    %8 = vsyncpa [#allocation6], 0
    %9 = vsyncpa [#allocation4], 0
    // Predicated region
    $region2: #{tpu_custom_call.1} parent=1 // pred_check
      _
    $region3: #{tpu_custom_call.1} parent=1 // pred_check_branch
      %11 = sbr.rel (0) target = $region5
    $region4: #{tpu_custom_call.1} parent=1 // pred_region
      %s13 = ssub.s32 128, 128
      %14 = vsyncadd [#allocation3], %s13
      %s16 = sshll.u32 [#allocation2], 4
      %s17 = int_to_ptr.vmem [resolvable:$true] %s16
      %19 = dma.hbm_to_vmem [thread:$0]  %s0, 128, %s17, [#allocation3]
    $region5: #{tpu_custom_call.1} parent=1 // pred_fallthru
      _
    // Predicated region
    $region6: #{tpu_custom_call.1} parent=1 // pred_check
      _
    $region7: #{tpu_custom_call.1} parent=1 // pred_check_branch
      %21 = sbr.rel (0) target = $region9
    $region8: #{tpu_custom_call.1} parent=1 // pred_region
      %s23 = ssub.s32 1664, 1664
      %24 = vsyncadd [#allocation6], %s23
      %s25 = sshll.u32 [#allocation5], 4
      %s26 = int_to_ptr.vmem [resolvable:$true] %s25
      %31 = dma.hbm_to_vmem [thread:$0]  %s1, 1664, %s26, [#allocation6], 128, 128, 8
    $region9: #{tpu_custom_call.1} parent=1 // pred_fallthru
      _
    // Predicated region
    $region10: #{tpu_custom_call.1} parent=1 // pred_check
      _
    $region11: #{tpu_custom_call.1} parent=1 // pred_check_branch
      %33 = sbr.rel (0) target = $region13
    $region12: #{tpu_custom_call.1} parent=1 // pred_region
      %34 = dma.done [#allocation3], 128
    $region13: #{tpu_custom_call.1} parent=1 // pred_fallthru
      _
    // Predicated region
    $region14: #{tpu_custom_call.1} parent=1 // pred_check
      _
    $region15: #{tpu_custom_call.1} parent=1 // pred_check_branch
      %36 = sbr.rel (0) target = $region17
    $region16: #{tpu_custom_call.1} parent=1 // pred_region
      %37 = dma.done [#allocation6], 1664
    $region17: #{tpu_custom_call.1} parent=1 // pred_fallthru
      _
    %v38 = vld [vmem:[#allocation2] sm:$0xff]
    %v39 = vld [vmem:[#allocation5] sm:$0xff]
    %v40 = vld [vmem:[#allocation5 + $0x8] sm:$0xff]
    %v41 = vld [vmem:[#allocation5 + $0x10] sm:$0xff]
    %vm42 = vcmask 195584
    %v44 = vsel %vm42, %v38, 0
    %46 = vmatprep.subr.mxu0 0.0
    %47 = vmatpush1.msra.mxu0 %v39
    %48 = vmatprep.subr.mxu0 0.0
    %49 = vmatpush1.msra.mxu0 %v40
    %50 = vmatprep.subr.mxu0 0.0
    %51 = vmatpush1.msra.mxu0 %v41
    %52 = vmatprep.subr.mxu0 0.0
    %53 = vmatpush1.msra.mxu0 0.0
    %54 = vmatprep.subr.mxu0 0.0
    %55 = vmatpush1.msra.mxu0 0.0
    %56 = vmatprep.subr.mxu0 0.0
    %57 = vmatpush1.msra.mxu0 0.0
    %58 = vmatprep.subr.mxu0 0.0
    %59 = vmatpush1.msra.mxu0 0.0
    %60 = vmatprep.subr.mxu0 0.0
    %61 = vmatpush1.msra.mxu0 0.0
    %62 = vmatprep.subr.mxu0 0.0
    %63 = vmatpush1.msra.mxu0 0.0
    %64 = vmatprep.subr.mxu0 0.0
    %65 = vmatpush1.msra.mxu0 0.0
    %66 = vmatprep.subr.mxu0 0.0
    %67 = vmatpush1.msra.mxu0 0.0
    %68 = vmatprep.subr.mxu0 0.0
    %69 = vmatpush1.msra.mxu0 0.0
    %70 = vmatprep.subr.mxu0 0.0
    %71 = vmatpush1.msra.mxu0 0.0
    %72 = vmatprep.subr.mxu0 0.0
    %73 = vmatpush1.msra.mxu0 0.0
    %74 = vmatprep.subr.mxu0 0.0
    %75 = vmatpush1.msra.mxu0 0.0
    %76 = vmatprep.subr.mxu0 0.0
    %77 = vmatpush1.msra.mxu0 0.0
    %78 = vmatprep.subr.mxu0 0.0
    %79 = vmatpush1.msra.mxu0 0.0
    %80 = vmatprep.subr.mxu0 0.0
    %81 = vmatpush1.msra.mxu0 0.0
    %82 = vmatprep.subr.mxu0 0.0
    %83 = vmatpush1.msra.mxu0 0.0
    %84 = vmatprep.subr.mxu0 0.0
    %85 = vmatpush1.msra.mxu0 0.0
    %86 = vmatprep.subr.mxu0 0.0
    %87 = vmatpush1.msra.mxu0 0.0
    %88 = vmatprep.subr.mxu0 0.0
    %89 = vmatpush1.msra.mxu0 0.0
    %90 = vmatprep.subr.mxu0 0.0
    %91 = vmatpush1.msra.mxu0 0.0
    %92 = vmatprep.subr.mxu0 0.0
    %93 = vmatpush1.msra.mxu0 0.0
    %94 = vmatprep.subr.mxu0 0.0
    %95 = vmatpush1.msra.mxu0 0.0
    %96 = vmatprep.subr.mxu0 0.0
    %97 = vmatpush1.msra.mxu0 0.0
    %98 = vmatprep.subr.mxu0 0.0
    %99 = vmatpush1.msra.mxu0 0.0
    %100 = vmatprep.subr.mxu0 0.0
    %101 = vmatpush1.msra.mxu0 0.0
    %102 = vmatprep.subr.mxu0 0.0
    %103 = vmatpush1.msra.mxu0 0.0
    %104 = vmatprep.subr.mxu0 0.0
    %105 = vmatpush1.msra.mxu0 0.0
    %106 = vmatprep.subr.mxu0 0.0
    %107 = vmatpush1.msra.mxu0 0.0
    %108 = vmatprep.subr.mxu0 0.0
    %109 = vmatpush1.msra.mxu0 0.0
    %110 = vmatprep.mubr.f32.mxu0 0.0
    %111 = vmatmul.mubr.f32.gmra.mrb[0].mxu0 %v44
    %v112 = vpop.f32.mrb[0].mxu0
    %v113 = vadd.f32 0.0, %v112
    %v114 = vpop.f32.mrb[0].mxu0
    %115 = vdwg.mxu0
    %v116 = vld [vmem:[#allocation5 + $0x18] sm:$0xff]
    %v117 = vld [vmem:[#allocation5 + $0x20] sm:$0xff]
    %v118 = vld [vmem:[#allocation5 + $0x28] sm:$0xff]
    %v119 = vld [vmem:[#allocation5 + $0x30] sm:$0xff]
    %v120 = vld [vmem:[#allocation5 + $0x38] sm:$0x1]
    %v121 = vlaneseq
    %v122 = vshrl.u32 %v121, 7
    %v123 = vsub.s32 0, %v122
    %v124 = vrot.slane %v120, %v123
    %vm125 = vcmask 261120
    %v127 = vsel %vm125, %v113, 0
    %129 = vmatprep.subr.mxu0 0.0
    %130 = vmatpush1.msra.mxu0 %v116
    %131 = vmatprep.subr.mxu0 0.0
    %132 = vmatpush1.msra.mxu0 %v117
    %133 = vmatprep.subr.mxu0 0.0
    %134 = vmatpush1.msra.mxu0 %v118
    %135 = vmatprep.subr.mxu0 0.0
    %136 = vmatpush1.msra.mxu0 %v119
    %137 = vmatprep.subr.mxu0 0.0
    %138 = vmatpush1.msra.mxu0 0.0
    %139 = vmatprep.subr.mxu0 0.0
    %140 = vmatpush1.msra.mxu0 0.0
    %141 = vmatprep.subr.mxu0 0.0
    %142 = vmatpush1.msra.mxu0 0.0
    %143 = vmatprep.subr.mxu0 0.0
    %144 = vmatpush1.msra.mxu0 0.0
    %145 = vmatprep.subr.mxu0 0.0
    %146 = vmatpush1.msra.mxu0 0.0
    %147 = vmatprep.subr.mxu0 0.0
    %148 = vmatpush1.msra.mxu0 0.0
    %149 = vmatprep.subr.mxu0 0.0
    %150 = vmatpush1.msra.mxu0 0.0
    %151 = vmatprep.subr.mxu0 0.0
    %152 = vmatpush1.msra.mxu0 0.0
    %153 = vmatprep.subr.mxu0 0.0
    %154 = vmatpush1.msra.mxu0 0.0
    %155 = vmatprep.subr.mxu0 0.0
    %156 = vmatpush1.msra.mxu0 0.0
    %157 = vmatprep.subr.mxu0 0.0
    %158 = vmatpush1.msra.mxu0 0.0
    %159 = vmatprep.subr.mxu0 0.0
    %160 = vmatpush1.msra.mxu0 0.0
    %161 = vmatprep.subr.mxu0 0.0
    %162 = vmatpush1.msra.mxu0 0.0
    %163 = vmatprep.subr.mxu0 0.0
    %164 = vmatpush1.msra.mxu0 0.0
    %165 = vmatprep.subr.mxu0 0.0
    %166 = vmatpush1.msra.mxu0 0.0
    %167 = vmatprep.subr.mxu0 0.0
    %168 = vmatpush1.msra.mxu0 0.0
    %169 = vmatprep.subr.mxu0 0.0
    %170 = vmatpush1.msra.mxu0 0.0
    %171 = vmatprep.subr.mxu0 0.0
    %172 = vmatpush1.msra.mxu0 0.0
    %173 = vmatprep.subr.mxu0 0.0
    %174 = vmatpush1.msra.mxu0 0.0
    %175 = vmatprep.subr.mxu0 0.0
    %176 = vmatpush1.msra.mxu0 0.0
    %177 = vmatprep.subr.mxu0 0.0
    %178 = vmatpush1.msra.mxu0 0.0
    %179 = vmatprep.subr.mxu0 0.0
    %180 = vmatpush1.msra.mxu0 0.0
    %181 = vmatprep.subr.mxu0 0.0
    %182 = vmatpush1.msra.mxu0 0.0
    %183 = vmatprep.subr.mxu0 0.0
    %184 = vmatpush1.msra.mxu0 0.0
    %185 = vmatprep.subr.mxu0 0.0
    %186 = vmatpush1.msra.mxu0 0.0
    %187 = vmatprep.subr.mxu0 0.0
    %188 = vmatpush1.msra.mxu0 0.0
    %189 = vmatprep.subr.mxu0 0.0
    %190 = vmatpush1.msra.mxu0 0.0
    %191 = vmatprep.subr.mxu0 0.0
    %192 = vmatpush1.msra.mxu0 0.0
    %193 = vmatprep.mubr.f32.mxu0 0.0
    %194 = vmatmul.mubr.f32.gmra.mrb[0].mxu0 %v127
    %v195 = vpop.f32.mrb[0].mxu0
    %v196 = vadd.f32 %v124, %v195
    %v197 = vpop.f32.mrb[0].mxu0
    %198 = vdwg.mxu0
    %v199 = vmax.f32 %v196, 0.0
    %v200 = vld [vmem:[#allocation5 + $0x40] sm:$0xff]
    %v201 = vld [vmem:[#allocation5 + $0x48] sm:$0xff]
    %v202 = vld [vmem:[#allocation5 + $0x50] sm:$0xff]
    %v203 = vld [vmem:[#allocation5 + $0x58] sm:$0xff]
    %v204 = vld [vmem:[#allocation5 + $0x60] sm:$0x1]
    %v205 = vlaneseq
    %v206 = vshrl.u32 %v205, 7
    %v207 = vsub.s32 0, %v206
    %v208 = vrot.slane %v204, %v207
    %v210 = vsel %vm125, %v199, 0
    %212 = vmatprep.subr.mxu0 0.0
    %213 = vmatpush1.msra.mxu0 %v200
    %214 = vmatprep.subr.mxu0 0.0
    %215 = vmatpush1.msra.mxu0 %v201
    %216 = vmatprep.subr.mxu0 0.0
    %217 = vmatpush1.msra.mxu0 %v202
    %218 = vmatprep.subr.mxu0 0.0
    %219 = vmatpush1.msra.mxu0 %v203
    %220 = vmatprep.subr.mxu0 0.0
    %221 = vmatpush1.msra.mxu0 0.0
    %222 = vmatprep.subr.mxu0 0.0
    %223 = vmatpush1.msra.mxu0 0.0
    %224 = vmatprep.subr.mxu0 0.0
    %225 = vmatpush1.msra.mxu0 0.0
    %226 = vmatprep.subr.mxu0 0.0
    %227 = vmatpush1.msra.mxu0 0.0
    %228 = vmatprep.subr.mxu0 0.0
    %229 = vmatpush1.msra.mxu0 0.0
    %230 = vmatprep.subr.mxu0 0.0
    %231 = vmatpush1.msra.mxu0 0.0
    %232 = vmatprep.subr.mxu0 0.0
    %233 = vmatpush1.msra.mxu0 0.0
    %234 = vmatprep.subr.mxu0 0.0
    %235 = vmatpush1.msra.mxu0 0.0
    %236 = vmatprep.subr.mxu0 0.0
    %237 = vmatpush1.msra.mxu0 0.0
    %238 = vmatprep.subr.mxu0 0.0
    %239 = vmatpush1.msra.mxu0 0.0
    %240 = vmatprep.subr.mxu0 0.0
    %241 = vmatpush1.msra.mxu0 0.0
    %242 = vmatprep.subr.mxu0 0.0
    %243 = vmatpush1.msra.mxu0 0.0
    %244 = vmatprep.subr.mxu0 0.0
    %245 = vmatpush1.msra.mxu0 0.0
    %246 = vmatprep.subr.mxu0 0.0
    %247 = vmatpush1.msra.mxu0 0.0
    %248 = vmatprep.subr.mxu0 0.0
    %249 = vmatpush1.msra.mxu0 0.0
    %250 = vmatprep.subr.mxu0 0.0
    %251 = vmatpush1.msra.mxu0 0.0
    %252 = vmatprep.subr.mxu0 0.0
    %253 = vmatpush1.msra.mxu0 0.0
    %254 = vmatprep.subr.mxu0 0.0
    %255 = vmatpush1.msra.mxu0 0.0
    %256 = vmatprep.subr.mxu0 0.0
    %257 = vmatpush1.msra.mxu0 0.0
    %258 = vmatprep.subr.mxu0 0.0
    %259 = vmatpush1.msra.mxu0 0.0
    %260 = vmatprep.subr.mxu0 0.0
    %261 = vmatpush1.msra.mxu0 0.0
    %262 = vmatprep.subr.mxu0 0.0
    %263 = vmatpush1.msra.mxu0 0.0
    %264 = vmatprep.subr.mxu0 0.0
    %265 = vmatpush1.msra.mxu0 0.0
    %266 = vmatprep.subr.mxu0 0.0
    %267 = vmatpush1.msra.mxu0 0.0
    %268 = vmatprep.subr.mxu0 0.0
    %269 = vmatpush1.msra.mxu0 0.0
    %270 = vmatprep.subr.mxu0 0.0
    %271 = vmatpush1.msra.mxu0 0.0
    %272 = vmatprep.subr.mxu0 0.0
    %273 = vmatpush1.msra.mxu0 0.0
    %274 = vmatprep.subr.mxu0 0.0
    %275 = vmatpush1.msra.mxu0 0.0
    %276 = vmatprep.mubr.f32.mxu0 0.0
    %277 = vmatmul.mubr.f32.gmra.mrb[0].mxu0 %v210
    %v278 = vpop.f32.mrb[0].mxu0
    %v279 = vadd.f32 %v208, %v278
    %v280 = vpop.f32.mrb[0].mxu0
    %281 = vdwg.mxu0
    %282 = vst [vmem:[#allocation7] sm:$0xff] %v279
    // Predicated region
    $region18: #{tpu_custom_call.1} parent=1 // pred_check
      _
    $region19: #{tpu_custom_call.1} parent=1 // pred_check_branch
      %284 = sbr.rel (0) target = $region21
    $region20: #{tpu_custom_call.1} parent=1 // pred_region
      %s286 = ssub.s32 128, 128
      %287 = vsyncadd [#allocation4], %s286
      %s289 = sshll.u32 [#allocation7], 4
      %s290 = int_to_ptr.vmem [resolvable:$true] %s289
      %292 = dma.vmem_to_hbm [thread:$0]  %s290, 128, %s2, [#allocation4]
    $region21: #{tpu_custom_call.1} parent=1 // pred_fallthru
      _
    // Predicated region
    $region22: #{tpu_custom_call.1} parent=1 // pred_check
      _
    $region23: #{tpu_custom_call.1} parent=1 // pred_check_branch
      %294 = sbr.rel (0) target = $region25
    $region24: #{tpu_custom_call.1} parent=1 // pred_region
      %295 = dma.done [#allocation4], 128
    $region25: #{tpu_custom_call.1} parent=1 // pred_fallthru
      _
    %296 = vsyncpa [#allocation3], 1
    %297 = vsyncpa [#allocation6], 1
    %298 = vsyncpa [#allocation4], 1

</llo_original>
